<compile_context>
chip_gen: v5e
topology: v5e:2x2
jax: 0.10.0
libtpu: 0.0.40
codegen_flags: <defaults>
</compile_context>

<pallas_src>
import jax
import jax.numpy as jnp
import numpy as np
from jax.experimental import pallas as pl
from jax.experimental.pallas import tpu as pltpu

_LANE = 128
_NEG_INF = float("-inf")


def _make_kernel(tile_c, tile_hw, num_masks, group, compute_dtype):
    n_sub = tile_hw // _LANE
    mask_ids = list(range(1, num_masks))                      # skip_zero=True
    groups = [mask_ids[i:i + group] for i in range(0, len(mask_ids), group)]
    # TODO(synk): for very large M (many groups) switch the static Python
    # unroll to a lax.fori_loop with pl.ds mask-row indexing to bound program
    # size / vreg live ranges.

    def kernel(enc_ref, mask_ref, out_ref, acc_ref):
        # enc_ref:  (tile_c, tile_hw)       one (b, c-tile, hw-tile) of encoded
        # mask_ref: (num_masks, tile_hw)    all mask channels, same hw-tile
        # out_ref:  (tile_c, num_masks - 1) final per-channel masked max
        # acc_ref:  (tile_c, num_masks - 1) f32 running max (resident scratch)
        hw_idx = pl.program_id(2)

        @pl.when(hw_idx == 0)
        def _init():
            acc_ref[...] = jnp.full(acc_ref.shape, _NEG_INF,
                                    dtype=acc_ref.dtype)

        # Inverted loop nest: lane chunks outermost, masks innermost within a
        # group.  The enc chunk vregs are reused across every mask in the
        # group; per-mask (tile_c, 128) running-max accumulators stay in vregs
        # across the chunk loop (no re-load of enc per mask).
        for grp in groups:
            accs = [None] * len(grp)
            for s in range(n_sub):
                lo = s * _LANE
                enc_s = enc_ref[:, lo:lo + _LANE].astype(compute_dtype)
                for gi, m in enumerate(grp):
                    sel = mask_ref[m:m + 1, lo:lo + _LANE] != 0   # (1, LANE)
                    val = jnp.where(sel, enc_s, _NEG_INF)         # VPU select
                    accs[gi] = (val if accs[gi] is None
                                else jnp.maximum(accs[gi], val))
            # One cross-lane (XLU) reduce per mask per hw tile, then a
            # column-wise max-accumulate into the resident f32 scratch.
            for gi, m in enumerate(grp):
                col = jnp.max(accs[gi], axis=-1,
                              keepdims=True).astype(jnp.float32)
                j = m - 1
                acc_ref[:, j:j + 1] = jnp.maximum(acc_ref[:, j:j + 1], col)

        @pl.when(hw_idx == pl.num_programs(2) - 1)
        def _finalize():
            out_ref[...] = acc_ref[...].astype(out_ref.dtype)

    return kernel


def _device_kind():
    try:
        return jax.devices()[0].device_kind.lower()
    except Exception:
        return ""


def vectors_from_mask(encoded, masks, skip_zero=True, tile_hw=None,
                      tile_c=None):
    """encoded: (B, C, H, W) float; masks: (B, M, H, W), nonzero == selected."""
    assert skip_zero, "only skip_zero=True is implemented (matches default)"
    B, C, H, W = encoded.shape
    Bm, M, Hm, Wm = masks.shape
    assert (Bm, Hm, Wm) == (B, H, W)
    assert M >= 2, "need at least one non-skipped mask channel"
    HW = H * W
    m_out = M - 1

    kind = _device_kind()
    is_v5 = "v5" in kind
    is_v7 = "v7" in kind

    enc2 = encoded.reshape(B, C, HW)
    msk2 = masks.reshape(B, M, HW)
    if msk2.dtype == jnp.bool_:
        msk2 = msk2.astype(jnp.int8)          # widen 1-bit bools only

    # ---- C tiling -----------------------------------------------------------
    if tile_c is None:
        tile_c = C if C <= 128 else 128
        # v7x has 2 TensorCores: when B == 1 split C so n_c >= 2 (parallel).
        if B == 1 and tile_c == C and C >= 16 and C % 16 == 0:
            tile_c = C // 2
    if tile_c >= C:
        tile_c, c_pad = C, C
    else:
        assert tile_c % 8 == 0, "partial C tiles must be a multiple of 8"
        c_pad = pl.cdiv(C, tile_c) * tile_c
    n_c = c_pad // tile_c

    # The (M, tile_hw) mask block is re-DMA'd once per C tile: keep it narrow.
    if n_c > 1 and jnp.dtype(msk2.dtype).itemsize > 1:
        msk2 = (msk2 != 0).astype(jnp.int8)

    # ---- HW tiling (bounded VMEM, wide lane-dense DMA tiles) ----------------
    if tile_hw is None:
        default_hw = 2048 if is_v7 else 4096      # v7x has half the VMEM
        tile_hw = min(default_hw, pl.cdiv(HW, _LANE) * _LANE)
    assert tile_hw % _LANE == 0
    hw_pad = pl.cdiv(HW, tile_hw) * tile_hw
    if hw_pad != HW:
        pad = hw_pad - HW
        enc2 = jnp.pad(enc2, ((0, 0), (0, 0), (0, pad)))
        # zero-padded mask -> padded pixels are never selected.
        msk2 = jnp.pad(msk2, ((0, 0), (0, 0), (0, pad)))
    n_hw = hw_pad // tile_hw

    if c_pad != C:
        enc2 = jnp.pad(enc2, ((0, 0), (0, c_pad - C), (0, 0)))

    # ---- compute dtype: bf16 on v6e/v7x, f32 on v5e (no bf16 VPU ALUs) ------
    if encoded.dtype == jnp.bfloat16 and not is_v5:
        compute_dtype = jnp.bfloat16
    else:
        compute_dtype = jnp.float32

    # ---- mask-group size: G accumulators + 1 enc chunk under ~48 live vregs -
    acc_vregs = max(1, (tile_c * _LANE
                        * jnp.dtype(compute_dtype).itemsize) // 4096)
    group = max(1, min(m_out, 48 // acc_vregs - 1))

    kernel = _make_kernel(tile_c, tile_hw, M, group, compute_dtype)

    enc_bytes = jnp.dtype(enc2.dtype).itemsize
    msk_bytes = jnp.dtype(msk2.dtype).itemsize
    out_bytes = jnp.dtype(encoded.dtype).itemsize
    block_bytes = (2 * tile_c * tile_hw * enc_bytes      # double-buffered enc
                   + 2 * M * tile_hw * msk_bytes         # double-buffered mask
                   + 2 * tile_c * m_out * out_bytes      # output block
                   + tile_c * m_out * 4)                 # f32 accumulator
    vmem_cap = (48 << 20) if is_v7 else (100 << 20)
    vmem_limit = int(min(max(2 * block_bytes + (8 << 20), 32 << 20), vmem_cap))

    cost = pl.CostEstimate(
        flops=2 * B * c_pad * hw_pad * m_out,
        transcendentals=0,
        bytes_accessed=(B * c_pad * hw_pad * enc_bytes
                        + n_c * B * M * hw_pad * msk_bytes   # re-read per C tile
                        + B * c_pad * m_out * out_bytes),
    )

    out = pl.pallas_call(
        kernel,
        out_shape=jax.ShapeDtypeStruct((B, c_pad, m_out), encoded.dtype),
        grid=(B, n_c, n_hw),
        in_specs=[
            pl.BlockSpec((None, tile_c, tile_hw),
                         lambda b, ci, hi: (b, ci, hi)),
            pl.BlockSpec((None, M, tile_hw),
                         lambda b, ci, hi: (b, 0, hi)),
        ],
        out_specs=pl.BlockSpec((None, tile_c, m_out),
                               lambda b, ci, hi: (b, ci, 0)),
        scratch_shapes=[pltpu.VMEM((tile_c, m_out), jnp.float32)],
        compiler_params=pltpu.CompilerParams(
            dimension_semantics=("parallel", "parallel", "arbitrary"),
            vmem_limit_bytes=vmem_limit),
        cost_estimate=cost,
    )(enc2, msk2)

    if c_pad != C:
        out = out[:, :C, :]
    # (B, C, M-1) -> (B, C, M-1, 1) to match torch: transpose(1,2).unsqueeze(3)
    return out[..., None]


def _reference(encoded, masks):
    B, C, H, W = encoded.shape
    M = masks.shape[1]
    enc = encoded.reshape(B, C, -1).astype(jnp.float32)       # (B, C, HW)
    msk = masks.reshape(B, M, -1) != 0                        # (B, M, HW)
    masked = jnp.where(msk[:, 1:, None, :], enc[:, None, :, :], -jnp.inf)
    red = jnp.max(masked, axis=-1)                            # (B, M-1, C)
    return jnp.transpose(red, (0, 2, 1))[..., None].astype(encoded.dtype)


if __name__ == "__main__":
    key = jax.random.PRNGKey(0)
    k_enc, k_msk, k_enc2, k_msk2 = jax.random.split(key, 4)

    # Config 1: float32 masks, full-C tile; default HW tiling (single tile ->
    # exercises the in-tile grouped reduce) and a forced 128-lane tiling
    # (exercises the running max across the "arbitrary" HW grid axis).
    B, C, H, W, M = 2, 8, 16, 16, 5
    encoded = jax.random.normal(k_enc, (B, C, H, W), dtype=jnp.float32)
    masks = jax.random.bernoulli(k_msk, p=0.3, shape=(B, M, H, W)).astype(
        jnp.float32)
    # Guarantee every (b, m) mask selects at least one pixel (PyTorch module
    # would error on an empty mask).
    masks = masks.at[:, :, 0, 0].set(1.0)
    ref = _reference(encoded, masks)
    for thw in (None, 128):
        out = vectors_from_mask(encoded, masks, tile_hw=thw)
        out = jax.block_until_ready(out)
        assert out.shape == (B, C, M - 1, 1), out.shape
        np.testing.assert_allclose(np.asarray(out), np.asarray(ref),
                                   rtol=1e-6, atol=1e-6)

    # Config 2: bool masks (narrow dtype path), B=1, C tiling (tile_c=8),
    # non-128-aligned HW (144 -> padded to 256) and two HW grid tiles.
    B2, C2, H2, W2, M2 = 1, 16, 12, 12, 3
    encoded2 = jax.random.normal(k_enc2, (B2, C2, H2, W2), dtype=jnp.float32)
    masks2 = jax.random.bernoulli(k_msk2, p=0.4, shape=(B2, M2, H2, W2))
    masks2 = masks2.at[:, :, 0, 0].set(True)   # no empty masks
    out2 = vectors_from_mask(encoded2, masks2, tile_hw=128, tile_c=8)
    out2 = jax.block_until_ready(out2)
    assert out2.shape == (B2, C2, M2 - 1, 1), out2.shape
    np.testing.assert_allclose(np.asarray(out2),
                               np.asarray(_reference(encoded2, masks2)),
                               rtol=1e-6, atol=1e-6)

    print("KERNEL_OK")
</pallas_src>

<mosaic_0001>
module attributes {stable_mosaic.version = 11 : i64} {
  func.func @kernel(%arg0: i32, %arg1: i32, %arg2: i32, %arg3: memref<1x8x256xf32, #tpu.memory_space<vmem>>, %arg4: memref<1x5x256xf32, #tpu.memory_space<vmem>>, %arg5: memref<1x8x4xf32, #tpu.memory_space<vmem>>, %arg6: memref<8x4xf32, #tpu.memory_space<vmem>>) attributes {dimension_semantics = [#tpu.dimension_semantics<parallel>, #tpu.dimension_semantics<parallel>, #tpu.dimension_semantics<arbitrary>], iteration_bounds = array<i64: 2, 1, 1>, scalar_prefetch = 0 : i64, scratch_operands = 1 : i64, tpu.core_type = #tpu.core_type<tc>, window_params = [{transform_indices = @transform_0, window_bounds = array<i64: 1, 8, 256>}, {transform_indices = @transform_1, window_bounds = array<i64: 1, 5, 256>}, {transform_indices = @transform_2, window_bounds = array<i64: 1, 8, 4>}]} {
    %c0_i32 = arith.constant 0 : i32
    %0 = arith.cmpi eq, %arg2, %c0_i32 : i32
    %1 = arith.extui %0 : i1 to i32
    %c0_i32_0 = arith.constant 0 : i32
    %2 = arith.cmpi ne, %1, %c0_i32_0 : i32
    scf.if %2 {
      %cst_62 = arith.constant 0xFF800000 : f32
      %98 = vector.broadcast %cst_62 : f32 to vector<8x4xf32>
      %c0_63 = arith.constant 0 : index
      %c0_64 = arith.constant 0 : index
      %99 = vector.load %arg6[%c0_63, %c0_64] : memref<8x4xf32, #tpu.memory_space<vmem>>, vector<8x4xf32>
      tpu.vector_store %arg6[%c0_63, %c0_64], %98 {strides = array<i32>} : memref<8x4xf32, #tpu.memory_space<vmem>>, vector<8x4xf32>,
    } else {
    }
    %c0 = arith.constant 0 : index
    %c0_1 = arith.constant 0 : index
    %c0_2 = arith.constant 0 : index
    %3 = vector.load %arg3[%c0, %c0_1, %c0_2] : memref<1x8x256xf32, #tpu.memory_space<vmem>>, vector<1x8x128xf32>
    %4 = vector.shape_cast %3 : vector<1x8x128xf32> to vector<8x128xf32>
    %c0_3 = arith.constant 0 : index
    %c1 = arith.constant 1 : index
    %c0_4 = arith.constant 0 : index
    %5 = vector.load %arg4[%c0_3, %c1, %c0_4] : memref<1x5x256xf32, #tpu.memory_space<vmem>>, vector<1x1x128xf32>
    %6 = vector.shape_cast %5 : vector<1x1x128xf32> to vector<1x128xf32>
    %cst = arith.constant 0.000000e+00 : f32
    %7 = vector.broadcast %cst : f32 to vector<1x128xf32>
    %8 = arith.cmpf one, %6, %7 : vector<1x128xf32>
    %cst_5 = arith.constant 0xFF800000 : f32
    %9 = vector.shape_cast %8 : vector<1x128xi1> to vector<1x128xi1>
    %10 = vector.broadcast %9 : vector<1x128xi1> to vector<8x128xi1>
    %11 = vector.broadcast %cst_5 : f32 to vector<8x128xf32>
    %12 = arith.select %10, %4, %11 : vector<8x128xi1>, vector<8x128xf32>
    %c0_6 = arith.constant 0 : index
    %c2 = arith.constant 2 : index
    %c0_7 = arith.constant 0 : index
    %13 = vector.load %arg4[%c0_6, %c2, %c0_7] : memref<1x5x256xf32, #tpu.memory_space<vmem>>, vector<1x1x128xf32>
    %14 = vector.shape_cast %13 : vector<1x1x128xf32> to vector<1x128xf32>
    %cst_8 = arith.constant 0.000000e+00 : f32
    %15 = vector.broadcast %cst_8 : f32 to vector<1x128xf32>
    %16 = arith.cmpf one, %14, %15 : vector<1x128xf32>
    %cst_9 = arith.constant 0xFF800000 : f32
    %17 = vector.shape_cast %16 : vector<1x128xi1> to vector<1x128xi1>
    %18 = vector.broadcast %17 : vector<1x128xi1> to vector<8x128xi1>
    %19 = vector.broadcast %cst_9 : f32 to vector<8x128xf32>
    %20 = arith.select %18, %4, %19 : vector<8x128xi1>, vector<8x128xf32>
    %c0_10 = arith.constant 0 : index
    %c3 = arith.constant 3 : index
    %c0_11 = arith.constant 0 : index
    %21 = vector.load %arg4[%c0_10, %c3, %c0_11] : memref<1x5x256xf32, #tpu.memory_space<vmem>>, vector<1x1x128xf32>
    %22 = vector.shape_cast %21 : vector<1x1x128xf32> to vector<1x128xf32>
    %cst_12 = arith.constant 0.000000e+00 : f32
    %23 = vector.broadcast %cst_12 : f32 to vector<1x128xf32>
    %24 = arith.cmpf one, %22, %23 : vector<1x128xf32>
    %cst_13 = arith.constant 0xFF800000 : f32
    %25 = vector.shape_cast %24 : vector<1x128xi1> to vector<1x128xi1>
    %26 = vector.broadcast %25 : vector<1x128xi1> to vector<8x128xi1>
    %27 = vector.broadcast %cst_13 : f32 to vector<8x128xf32>
    %28 = arith.select %26, %4, %27 : vector<8x128xi1>, vector<8x128xf32>
    %c0_14 = arith.constant 0 : index
    %c4 = arith.constant 4 : index
    %c0_15 = arith.constant 0 : index
    %29 = vector.load %arg4[%c0_14, %c4, %c0_15] : memref<1x5x256xf32, #tpu.memory_space<vmem>>, vector<1x1x128xf32>
    %30 = vector.shape_cast %29 : vector<1x1x128xf32> to vector<1x128xf32>
    %cst_16 = arith.constant 0.000000e+00 : f32
    %31 = vector.broadcast %cst_16 : f32 to vector<1x128xf32>
    %32 = arith.cmpf one, %30, %31 : vector<1x128xf32>
    %cst_17 = arith.constant 0xFF800000 : f32
    %33 = vector.shape_cast %32 : vector<1x128xi1> to vector<1x128xi1>
    %34 = vector.broadcast %33 : vector<1x128xi1> to vector<8x128xi1>
    %35 = vector.broadcast %cst_17 : f32 to vector<8x128xf32>
    %36 = arith.select %34, %4, %35 : vector<8x128xi1>, vector<8x128xf32>
    %c0_18 = arith.constant 0 : index
    %c0_19 = arith.constant 0 : index
    %c128 = arith.constant 128 : index
    %37 = vector.load %arg3[%c0_18, %c0_19, %c128] : memref<1x8x256xf32, #tpu.memory_space<vmem>>, vector<1x8x128xf32>
    %38 = vector.shape_cast %37 : vector<1x8x128xf32> to vector<8x128xf32>
    %c0_20 = arith.constant 0 : index
    %c1_21 = arith.constant 1 : index
    %c128_22 = arith.constant 128 : index
    %39 = vector.load %arg4[%c0_20, %c1_21, %c128_22] : memref<1x5x256xf32, #tpu.memory_space<vmem>>, vector<1x1x128xf32>
    %40 = vector.shape_cast %39 : vector<1x1x128xf32> to vector<1x128xf32>
    %cst_23 = arith.constant 0.000000e+00 : f32
    %41 = vector.broadcast %cst_23 : f32 to vector<1x128xf32>
    %42 = arith.cmpf one, %40, %41 : vector<1x128xf32>
    %cst_24 = arith.constant 0xFF800000 : f32
    %43 = vector.shape_cast %42 : vector<1x128xi1> to vector<1x128xi1>
    %44 = vector.broadcast %43 : vector<1x128xi1> to vector<8x128xi1>
    %45 = vector.broadcast %cst_24 : f32 to vector<8x128xf32>
    %46 = arith.select %44, %38, %45 : vector<8x128xi1>, vector<8x128xf32>
    %47 = arith.maximumf %12, %46 : vector<8x128xf32>
    %c0_25 = arith.constant 0 : index
    %c2_26 = arith.constant 2 : index
    %c128_27 = arith.constant 128 : index
    %48 = vector.load %arg4[%c0_25, %c2_26, %c128_27] : memref<1x5x256xf32, #tpu.memory_space<vmem>>, vector<1x1x128xf32>
    %49 = vector.shape_cast %48 : vector<1x1x128xf32> to vector<1x128xf32>
    %cst_28 = arith.constant 0.000000e+00 : f32
    %50 = vector.broadcast %cst_28 : f32 to vector<1x128xf32>
    %51 = arith.cmpf one, %49, %50 : vector<1x128xf32>
    %cst_29 = arith.constant 0xFF800000 : f32
    %52 = vector.shape_cast %51 : vector<1x128xi1> to vector<1x128xi1>
    %53 = vector.broadcast %52 : vector<1x128xi1> to vector<8x128xi1>
    %54 = vector.broadcast %cst_29 : f32 to vector<8x128xf32>
    %55 = arith.select %53, %38, %54 : vector<8x128xi1>, vector<8x128xf32>
    %56 = arith.maximumf %20, %55 : vector<8x128xf32>
    %c0_30 = arith.constant 0 : index
    %c3_31 = arith.constant 3 : index
    %c128_32 = arith.constant 128 : index
    %57 = vector.load %arg4[%c0_30, %c3_31, %c128_32] : memref<1x5x256xf32, #tpu.memory_space<vmem>>, vector<1x1x128xf32>
    %58 = vector.shape_cast %57 : vector<1x1x128xf32> to vector<1x128xf32>
    %cst_33 = arith.constant 0.000000e+00 : f32
    %59 = vector.broadcast %cst_33 : f32 to vector<1x128xf32>
    %60 = arith.cmpf one, %58, %59 : vector<1x128xf32>
    %cst_34 = arith.constant 0xFF800000 : f32
    %61 = vector.shape_cast %60 : vector<1x128xi1> to vector<1x128xi1>
    %62 = vector.broadcast %61 : vector<1x128xi1> to vector<8x128xi1>
    %63 = vector.broadcast %cst_34 : f32 to vector<8x128xf32>
    %64 = arith.select %62, %38, %63 : vector<8x128xi1>, vector<8x128xf32>
    %65 = arith.maximumf %28, %64 : vector<8x128xf32>
    %c0_35 = arith.constant 0 : index
    %c4_36 = arith.constant 4 : index
    %c128_37 = arith.constant 128 : index
    %66 = vector.load %arg4[%c0_35, %c4_36, %c128_37] : memref<1x5x256xf32, #tpu.memory_space<vmem>>, vector<1x1x128xf32>
    %67 = vector.shape_cast %66 : vector<1x1x128xf32> to vector<1x128xf32>
    %cst_38 = arith.constant 0.000000e+00 : f32
    %68 = vector.broadcast %cst_38 : f32 to vector<1x128xf32>
    %69 = arith.cmpf one, %67, %68 : vector<1x128xf32>
    %cst_39 = arith.constant 0xFF800000 : f32
    %70 = vector.shape_cast %69 : vector<1x128xi1> to vector<1x128xi1>
    %71 = vector.broadcast %70 : vector<1x128xi1> to vector<8x128xi1>
    %72 = vector.broadcast %cst_39 : f32 to vector<8x128xf32>
    %73 = arith.select %71, %38, %72 : vector<8x128xi1>, vector<8x128xf32>
    %74 = arith.maximumf %36, %73 : vector<8x128xf32>
    %cst_40 = arith.constant dense<0xFF800000> : vector<8xf32>
    %75 = vector.multi_reduction <maximumf>, %47, %cst_40 [1] : vector<8x128xf32> to vector<8xf32>
    %76 = vector.shape_cast %75 : vector<8xf32> to vector<8x1xf32>
    %c0_41 = arith.constant 0 : index
    %c0_42 = arith.constant 0 : index
    %77 = vector.load %arg6[%c0_41, %c0_42] : memref<8x4xf32, #tpu.memory_space<vmem>>, vector<8x1xf32>
    %78 = arith.maximumf %77, %76 : vector<8x1xf32>
    %c0_43 = arith.constant 0 : index
    %c0_44 = arith.constant 0 : index
    %79 = vector.load %arg6[%c0_43, %c0_44] : memref<8x4xf32, #tpu.memory_space<vmem>>, vector<8x1xf32>
    tpu.vector_store %arg6[%c0_43, %c0_44], %78 {strides = array<i32>} : memref<8x4xf32, #tpu.memory_space<vmem>>, vector<8x1xf32>,
    %cst_45 = arith.constant dense<0xFF800000> : vector<8xf32>
    %80 = vector.multi_reduction <maximumf>, %56, %cst_45 [1] : vector<8x128xf32> to vector<8xf32>
    %81 = vector.shape_cast %80 : vector<8xf32> to vector<8x1xf32>
    %c0_46 = arith.constant 0 : index
    %c1_47 = arith.constant 1 : index
    %82 = vector.load %arg6[%c0_46, %c1_47] : memref<8x4xf32, #tpu.memory_space<vmem>>, vector<8x1xf32>
    %83 = arith.maximumf %82, %81 : vector<8x1xf32>
    %c0_48 = arith.constant 0 : index
    %c1_49 = arith.constant 1 : index
    %84 = vector.load %arg6[%c0_48, %c1_49] : memref<8x4xf32, #tpu.memory_space<vmem>>, vector<8x1xf32>
    tpu.vector_store %arg6[%c0_48, %c1_49], %83 {strides = array<i32>} : memref<8x4xf32, #tpu.memory_space<vmem>>, vector<8x1xf32>,
    %cst_50 = arith.constant dense<0xFF800000> : vector<8xf32>
    %85 = vector.multi_reduction <maximumf>, %65, %cst_50 [1] : vector<8x128xf32> to vector<8xf32>
    %86 = vector.shape_cast %85 : vector<8xf32> to vector<8x1xf32>
    %c0_51 = arith.constant 0 : index
    %c2_52 = arith.constant 2 : index
    %87 = vector.load %arg6[%c0_51, %c2_52] : memref<8x4xf32, #tpu.memory_space<vmem>>, vector<8x1xf32>
    %88 = arith.maximumf %87, %86 : vector<8x1xf32>
    %c0_53 = arith.constant 0 : index
    %c2_54 = arith.constant 2 : index
    %89 = vector.load %arg6[%c0_53, %c2_54] : memref<8x4xf32, #tpu.memory_space<vmem>>, vector<8x1xf32>
    tpu.vector_store %arg6[%c0_53, %c2_54], %88 {strides = array<i32>} : memref<8x4xf32, #tpu.memory_space<vmem>>, vector<8x1xf32>,
    %cst_55 = arith.constant dense<0xFF800000> : vector<8xf32>
    %90 = vector.multi_reduction <maximumf>, %74, %cst_55 [1] : vector<8x128xf32> to vector<8xf32>
    %91 = vector.shape_cast %90 : vector<8xf32> to vector<8x1xf32>
    %c0_56 = arith.constant 0 : index
    %c3_57 = arith.constant 3 : index
    %92 = vector.load %arg6[%c0_56, %c3_57] : memref<8x4xf32, #tpu.memory_space<vmem>>, vector<8x1xf32>
    %93 = arith.maximumf %92, %91 : vector<8x1xf32>
    %c0_58 = arith.constant 0 : index
    %c3_59 = arith.constant 3 : index
    %94 = vector.load %arg6[%c0_58, %c3_59] : memref<8x4xf32, #tpu.memory_space<vmem>>, vector<8x1xf32>
    tpu.vector_store %arg6[%c0_58, %c3_59], %93 {strides = array<i32>} : memref<8x4xf32, #tpu.memory_space<vmem>>, vector<8x1xf32>,
    %c0_i32_60 = arith.constant 0 : i32
    %95 = arith.cmpi eq, %arg2, %c0_i32_60 : i32
    %96 = arith.extui %95 : i1 to i32
    %c0_i32_61 = arith.constant 0 : i32
    %97 = arith.cmpi ne, %96, %c0_i32_61 : i32
    scf.if %97 {
      %c0_62 = arith.constant 0 : index
      %c0_63 = arith.constant 0 : index
      %98 = vector.load %arg6[%c0_62, %c0_63] : memref<8x4xf32, #tpu.memory_space<vmem>>, vector<8x4xf32>
      %c0_64 = arith.constant 0 : index
      %c0_65 = arith.constant 0 : index
      %c0_66 = arith.constant 0 : index
      %99 = vector.load %arg5[%c0_64, %c0_65, %c0_66] : memref<1x8x4xf32, #tpu.memory_space<vmem>>, vector<1x8x4xf32>
      %100 = vector.shape_cast %99 : vector<1x8x4xf32> to vector<8x4xf32>
      %101 = vector.shape_cast %98 : vector<8x4xf32> to vector<1x8x4xf32>
      tpu.vector_store %arg5[%c0_64, %c0_65, %c0_66], %101 {strides = array<i32>} : memref<1x8x4xf32, #tpu.memory_space<vmem>>, vector<1x8x4xf32>,
    } else {
    }
    return
  }
  func.func @transform_0(%arg0: i32, %arg1: i32, %arg2: i32) -> (i32, i32, i32) {
    %c0_i32 = arith.constant 0 : i32
    return %arg0, %arg1, %arg2 : i32, i32, i32
  }
  func.func @transform_1(%arg0: i32, %arg1: i32, %arg2: i32) -> (i32, i32, i32) {
    %c0_i32 = arith.constant 0 : i32
    %c0_i32_0 = arith.constant 0 : i32
    return %arg0, %c0_i32, %arg2 : i32, i32, i32
  }
  func.func @transform_2(%arg0: i32, %arg1: i32, %arg2: i32) -> (i32, i32, i32) {
    %c0_i32 = arith.constant 0 : i32
    %c0_i32_0 = arith.constant 0 : i32
    return %arg0, %arg1, %c0_i32 : i32, i32, i32
  }
}

</mosaic_0001>

<llo_original>
// kernel: tpu_custom_call.1
$region0: #{tpu_custom_call.1}
  #allocation0 [shape = 'u32[]', space=smem, size = 0x4, offset = 0x4, fixed_abs, tag = 'smem constant byte address 0x4 - core index']
  #allocation1 [shape = 'u32[72,128]{1,0:T(1,128)}', space=vmem, size = 0x9000, scoped, tag = 'internal scratch']
  #allocation2 [shape = 'f32[8,4]{1,0:T(8,128)}', space=vmem, size = 0x1000, scoped, tag = 'scratch operand']
  %s0 = inlined_call_operand.vmem [shape: f32[2,8,256], index: 0, kind: input, shape index: {}]
  %s1 = inlined_call_operand.vmem [shape: f32[2,5,256], index: 1, kind: input, shape index: {}]
  %s2 = inlined_call_operand.vmem [shape: f32[2,8,4], index: 2, kind: output, shape index: {}]
  %s3 = sld [smem:[#allocation0]]
  $region49: #{tpu_custom_call.1} parent=0
    _
  %s5 = ssub.s32 1, %s3
  %s6 = scalar_select 0, %s5, %s3
  loop: start=0, step=1, limit=4
  $region2: #{tpu_custom_call.1} parent=0 // loop_pre_header
    _
  $region3: #{tpu_custom_call.1} parent=0 // loop_header
    %s8 = sphi 0, %s12
    %p9 = scmp.ge.s32.totalorder %s8, 4
    %s15 = sphi 0, %s34
    %s16 = sphi 0, %s30
    %s17 = sphi 0, %s26
    %s18 = sphi 0, %s15
    %s19 = sphi 0, %s16
    %s20 = sphi 0, %s17
    %s21 = sphi 0, %s18
    %s22 = sphi 0, %s19
    %s23 = sphi 0, %s20
    %s41 = sphi 0, %s43
    %s44 = sphi 0, %s41
    %s45 = sphi 0, %s44
    %s61 = sphi 0, %s45
    %s69 = sphi 0, %s71
    %s72 = sphi 0, %s69
    %s73 = sphi 0, %s72
    %s89 = sphi 0, %s73
    %s97 = sphi 0, %s99
    %s100 = sphi 0, %s97
    %s101 = sphi 0, %s100
    %s117 = sphi 0, %s101
  $region4: #{tpu_custom_call.1} parent=0 // loop_header_branch
    %11 = sbr.rel (%p9) target = $region8
  $region5: #{tpu_custom_call.1} parent=0 // loop_body
    %s13 = ssub.s32 %s8, 1
    %s14 = ssub.s32 %s8, 2
    %s24 = sadd.s32 1, %s17
    %p25 = scmp.ge.s32.totalorder %s24, 1
    %s26 = scalar_select %p25, 0, %s24
    %s27 = sadd.s32 1, %s16
    %s28 = scalar_select %p25, %s27, %s16
    %p29 = scmp.ge.s32.totalorder %s28, 1
    %s30 = scalar_select %p29, 0, %s28
    %s31 = sadd.s32 1, %s15
    %s32 = scalar_select %p29, %s31, %s15
    %p33 = scmp.ge.s32.totalorder %s32, 2
    %s34 = scalar_select %p33, 0, %s32
    %s35 = ssub.s32 %s15, %s34
    %s36 = ssub.s32 %s16, %s30
    %s37 = sor.u32 %s35, %s36
    %s38 = ssub.s32 %s17, %s26
    %s39 = sor.u32 %s37, %s38
    %p40 = scmp.eq.s32.totalorder %s39, 0
    %s42 = sadd.s32 %s41, 1
    %s43 = scalar_select %p40, %s41, %s42
    %p46 = pneg %p40
    %p47 = scmp.eq.s32.totalorder %s8, 1
    %p48 = por %p46, %p47
    %p49 = scmp.ne.s32.totalorder %s41, %s44
    %p50 = scmp.eq.s32.totalorder %s8, 0
    %p51 = por %p49, %p50
    %p52 = scmp.ne.s32.totalorder %s41, %s44
    %p53 = scmp.eq.s32.totalorder %s13, 1
    %p54 = por %p52, %p53
    %p55 = scmp.ne.s32.totalorder %s44, %s45
    %p56 = scmp.eq.s32.totalorder %s13, 0
    %p57 = por %p55, %p56
    %p58 = scmp.ne.s32.totalorder %s44, %s45
    %p59 = scmp.eq.s32.totalorder %s14, 1
    %p60 = por %p58, %p59
    %p62 = scmp.ne.s32.totalorder %s45, %s61
    %p63 = scmp.eq.s32.totalorder %s14, 0
    %p64 = por %p62, %p63
    %s65 = ssub.s32 %s15, %s34
    %s66 = ssub.s32 %s17, %s26
    %s67 = sor.u32 %s65, %s66
    %p68 = scmp.eq.s32.totalorder %s67, 0
    %s70 = sadd.s32 %s69, 1
    %s71 = scalar_select %p68, %s69, %s70
    %p74 = pneg %p68
    %p75 = scmp.eq.s32.totalorder %s8, 1
    %p76 = por %p74, %p75
    %p77 = scmp.ne.s32.totalorder %s69, %s72
    %p78 = scmp.eq.s32.totalorder %s8, 0
    %p79 = por %p77, %p78
    %p80 = scmp.ne.s32.totalorder %s69, %s72
    %p81 = scmp.eq.s32.totalorder %s13, 1
    %p82 = por %p80, %p81
    %p83 = scmp.ne.s32.totalorder %s72, %s73
    %p84 = scmp.eq.s32.totalorder %s13, 0
    %p85 = por %p83, %p84
    %p86 = scmp.ne.s32.totalorder %s72, %s73
    %p87 = scmp.eq.s32.totalorder %s14, 1
    %p88 = por %p86, %p87
    %p90 = scmp.ne.s32.totalorder %s73, %s89
    %p91 = scmp.eq.s32.totalorder %s14, 0
    %p92 = por %p90, %p91
    %s93 = ssub.s32 %s15, %s34
    %s94 = ssub.s32 %s16, %s30
    %s95 = sor.u32 %s93, %s94
    %p96 = scmp.eq.s32.totalorder %s95, 0
    %s98 = sadd.s32 %s97, 1
    %s99 = scalar_select %p96, %s97, %s98
    %p102 = pneg %p96
    %p103 = scmp.eq.s32.totalorder %s8, 1
    %p104 = por %p102, %p103
    %p105 = scmp.ne.s32.totalorder %s97, %s100
    %p106 = scmp.eq.s32.totalorder %s8, 0
    %p107 = por %p105, %p106
    %p108 = scmp.ne.s32.totalorder %s97, %s100
    %p109 = scmp.eq.s32.totalorder %s13, 1
    %p110 = por %p108, %p109
    %p111 = scmp.ne.s32.totalorder %s100, %s101
    %p112 = scmp.eq.s32.totalorder %s13, 0
    %p113 = por %p111, %p112
    %p114 = scmp.ne.s32.totalorder %s100, %s101
    %p115 = scmp.eq.s32.totalorder %s14, 1
    %p116 = por %p114, %p115
    %p118 = scmp.ne.s32.totalorder %s101, %s117
    %p119 = scmp.eq.s32.totalorder %s14, 0
    %p120 = por %p118, %p119
    %p121 = scmp.le.s32.totalorder 1, %s8
    %p122 = scmp.lt.s32.totalorder %s8, 3
    %p123 = pnand %p121, %p122
    %p124 = pneg %p123
    // Predicated region
    $region9: #{tpu_custom_call.1} parent=5 // pred_check
      _
    $region10: #{tpu_custom_call.1} parent=5 // pred_check_branch
      %126 = sbr.rel (%p123) target = $region12
    $region11: #{tpu_custom_call.1} parent=5 // pred_region
      %s127 = ssub.s32 %s8, 1
    $region12: #{tpu_custom_call.1} parent=5 // pred_fallthru
      _
    %p128 = scmp.lt.s32.totalorder %s8, 2
    // Predicated region
    $region13: #{tpu_custom_call.1} parent=5 // pred_check
      %p129 = pneg %p128
    $region14: #{tpu_custom_call.1} parent=5 // pred_check_branch
      %131 = sbr.rel (%p129) target = $region16
    $region15: #{tpu_custom_call.1} parent=5 // pred_region
      // Predicated region
      $region17: #{tpu_custom_call.1} parent=15 // pred_check
        %p132 = pneg %p51
      $region18: #{tpu_custom_call.1} parent=15 // pred_check_branch
        %134 = sbr.rel (%p132) target = $region20
      $region19: #{tpu_custom_call.1} parent=15 // pred_region
        %s135 = smul.u32 2, %s17
        %p136 = scmp.lt.s32.totalorder %s15, 1
        %s137 = scalar_select %p136, %s15, 1
        %p138 = scmp.lt.s32.totalorder %s16, 0
        %s139 = scalar_select %p138, %s16, 0
        %p140 = scmp.lt.s32.totalorder %s135, 1
        %s141 = scalar_select %p140, %s135, 1
        %s142 = smul.addr %s139, 2
        %s143 = sadd.s32 %s141, %s142
        %s144 = smul.addr %s137, 2
        %s145 = sadd.s32 %s143, %s144
        %s146 = smul.addr %s145, 8
        %s147 = scalar_lea.vmem %s0, %s146
        %s148 = smul.u32 2, %s17
      $region20: #{tpu_custom_call.1} parent=15 // pred_fallthru
        _
      // Predicated region
      $region21: #{tpu_custom_call.1} parent=15 // pred_check
        %p149 = pneg %p79
      $region22: #{tpu_custom_call.1} parent=15 // pred_check_branch
        %151 = sbr.rel (%p149) target = $region24
      $region23: #{tpu_custom_call.1} parent=15 // pred_region
        %s152 = smul.u32 2, %s17
        %p153 = scmp.lt.s32.totalorder %s15, 1
        %s154 = scalar_select %p153, %s15, 1
        %p155 = scmp.lt.s32.totalorder %s152, 1
        %s156 = scalar_select %p155, %s152, 1
        %s157 = smul.addr %s154, 2
        %s158 = sadd.s32 %s156, %s157
        %s159 = smul.addr %s158, 8
        %s160 = scalar_lea.vmem %s1, %s159
        %s161 = smul.u32 2, %s17
      $region24: #{tpu_custom_call.1} parent=15 // pred_fallthru
        _
    $region16: #{tpu_custom_call.1} parent=5 // pred_fallthru
      _
    %p162 = scmp.le.s32.totalorder 1, %s8
    %p163 = scmp.lt.s32.totalorder %s8, 3
    %p164 = pnand %p162, %p163
    %p165 = pneg %p164
    // Predicated region
    $region25: #{tpu_custom_call.1} parent=5 // pred_check
      _
    $region26: #{tpu_custom_call.1} parent=5 // pred_check_branch
      %167 = sbr.rel (%p164) target = $region28
    $region27: #{tpu_custom_call.1} parent=5 // pred_region
      %s168 = ssub.s32 %s8, 1
      %s169 = smul.u32 2, %s20
      %p170 = scmp.lt.s32.totalorder %s18, 1
      %s171 = scalar_select %p170, %s18, 1
      %p172 = scmp.lt.s32.totalorder %s19, 0
      %s173 = scalar_select %p172, %s19, 0
      %p174 = scmp.lt.s32.totalorder %s169, 1
      %s175 = scalar_select %p174, %s169, 1
      %s176 = smul.addr %s173, 2
      %s177 = sadd.s32 %s175, %s176
      %s178 = smul.addr %s171, 2
      %s179 = sadd.s32 %s177, %s178
      %s180 = smul.addr %s179, 8
      %s181 = scalar_lea.vmem %s0, %s180
      %p182 = pneg %p57
      %p183 = pneg %p54
      %s184 = smul.u32 2, %s20
      %p185 = scmp.lt.s32.totalorder %s18, 1
      %s186 = scalar_select %p185, %s18, 1
      %p187 = scmp.lt.s32.totalorder %s184, 1
      %s188 = scalar_select %p187, %s184, 1
      %s189 = smul.addr %s186, 2
      %s190 = sadd.s32 %s188, %s189
      %s191 = smul.addr %s190, 8
      %s192 = scalar_lea.vmem %s1, %s191
      %p193 = pneg %p85
      %p194 = pneg %p82
      %p195 = pneg %p113
      %p196 = pneg %p110
      %p197 = scmp.lt.s32.totalorder %s18, 1
      %s198 = scalar_select %p197, %s18, 1
      %p199 = scmp.lt.s32.totalorder %s19, 0
      %s200 = scalar_select %p199, %s19, 0
      %s201 = sadd.s32 %s200, %s198
      %s202 = smul.addr %s201, 8
      %s203 = scalar_lea.vmem %s2, %s202
      %s204 = smul.u32 2, %s20
      %p205 = scmp.lt.s32.totalorder %s18, 1
      %s206 = scalar_select %p205, %s18, 1
      %p207 = scmp.lt.s32.totalorder %s19, 0
      %s208 = scalar_select %p207, %s19, 0
      %p209 = scmp.lt.s32.totalorder %s204, 1
      %s210 = scalar_select %p209, %s204, 1
      %s211 = smul.addr %s208, 2
      %s212 = sadd.s32 %s210, %s211
      %s213 = smul.addr %s206, 2
      %s214 = sadd.s32 %s212, %s213
      %s215 = smul.addr %s214, 8
      %s216 = scalar_lea.vmem %s0, %s215
      %s217 = smul.u32 2, %s20
      %s218 = smul.u32 2, %s20
      %p219 = scmp.lt.s32.totalorder %s18, 1
      %s220 = scalar_select %p219, %s18, 1
      %p221 = scmp.lt.s32.totalorder %s218, 1
      %s222 = scalar_select %p221, %s218, 1
      %s223 = smul.addr %s220, 2
      %s224 = sadd.s32 %s222, %s223
      %s225 = smul.addr %s224, 8
      %s226 = scalar_lea.vmem %s1, %s225
      %s227 = smul.u32 2, %s20
      %p228 = scmp.lt.s32.totalorder %s18, 1
      %s229 = scalar_select %p228, %s18, 1
      %p230 = scmp.lt.s32.totalorder %s19, 0
      %s231 = scalar_select %p230, %s19, 0
      %s232 = sadd.s32 %s231, %s229
      %s233 = smul.addr %s232, 8
      %s234 = scalar_lea.vmem %s2, %s233
      %p235 = scmp.eq.s32.totalorder %s20, 0
      // Predicated region
      $region29: #{tpu_custom_call.1} parent=27 // pred_check
        %p236 = pneg %p235
      $region30: #{tpu_custom_call.1} parent=27 // pred_check_branch
        %238 = sbr.rel (%p236) target = $region32
      $region31: #{tpu_custom_call.1} parent=27 // pred_region
        %vm239 = vcmask 31744
        %240 = vst.msk [vmem:[#allocation2] sm:$0xff] %vm239, -inf
      $region32: #{tpu_custom_call.1} parent=27 // pred_fallthru
        _
      %v241 = vld [vmem:[%s216] sm:$0xff]
      %v242 = vld [vmem:[%s226 + $0x1] ss:$0 sm:$0xff]
      %vm243 = vcmp.ne.f32.partialorder %v242, 0.0
      %v244 = vsel %vm243, 1, 0
      %vm245 = vcmp.eq.s32.totalorder %v244, 1
      %v246 = vsel %vm245, %v241, -inf
      %v247 = vld [vmem:[%s226 + $0x2] ss:$0 sm:$0xff]
      %vm248 = vcmp.ne.f32.partialorder %v247, 0.0
      %v249 = vsel %vm248, 1, 0
      %vm250 = vcmp.eq.s32.totalorder %v249, 1
      %v251 = vsel %vm250, %v241, -inf
      %v252 = vld [vmem:[%s226 + $0x3] ss:$0 sm:$0xff]
      %vm253 = vcmp.ne.f32.partialorder %v252, 0.0
      %v254 = vsel %vm253, 1, 0
      %vm255 = vcmp.eq.s32.totalorder %v254, 1
      %v256 = vsel %vm255, %v241, -inf
      %v257 = vld [vmem:[%s226 + $0x4] ss:$0 sm:$0xff]
      %vm258 = vcmp.ne.f32.partialorder %v257, 0.0
      %v259 = vsel %vm258, 1, 0
      %vm260 = vcmp.eq.s32.totalorder %v259, 1
      %v261 = vsel %vm260, %v241, -inf
      %v262 = vld [vmem:[%s216 + $0x8] sm:$0xff]
      %v263 = vld [vmem:[%s226 + $0x9] ss:$0 sm:$0xff]
      %vm264 = vcmp.ne.f32.partialorder %v263, 0.0
      %v265 = vsel %vm264, 1, 0
      %vm266 = vcmp.eq.s32.totalorder %v265, 1
      %v267 = vsel %vm266, %v262, -inf
      %v268 = vmax.f32 %v246, %v267
      %v269 = vld [vmem:[%s226 + $0xa] ss:$0 sm:$0xff]
      %vm270 = vcmp.ne.f32.partialorder %v269, 0.0
      %v271 = vsel %vm270, 1, 0
      %vm272 = vcmp.eq.s32.totalorder %v271, 1
      %v273 = vsel %vm272, %v262, -inf
      %v274 = vmax.f32 %v251, %v273
      %v275 = vld [vmem:[%s226 + $0xb] ss:$0 sm:$0xff]
      %vm276 = vcmp.ne.f32.partialorder %v275, 0.0
      %v277 = vsel %vm276, 1, 0
      %vm278 = vcmp.eq.s32.totalorder %v277, 1
      %v279 = vsel %vm278, %v262, -inf
      %v280 = vmax.f32 %v256, %v279
      %v281 = vld [vmem:[%s226 + $0xc] ss:$0 sm:$0xff]
      %vm282 = vcmp.ne.f32.partialorder %v281, 0.0
      %v283 = vsel %vm282, 1, 0
      %vm284 = vcmp.eq.s32.totalorder %v283, 1
      %v285 = vsel %vm284, %v262, -inf
      %v286 = vmax.f32 %v261, %v285
      %287 = vmax.xlane.f32.xlu0 %v268
      %v288 = vpop.xlane.xlu0 %287
      %v289 = vld [vmem:[#allocation2] sm:$0xff]
      %v290 = vmax.f32 %v289, %v288
      %vm291 = vcmask 7168
      %292 = vst.msk [vmem:[#allocation2] sm:$0xff] %vm291, %v290
      %293 = vmax.xlane.f32.xlu0 %v274
      %v294 = vpop.xlane.xlu0 %293
      %v295 = vld [vmem:[#allocation2] sm:$0xff]
      %v296 = vmax.f32 %v295, %v294
      %vm297 = vcmask 15368
      %298 = vst.msk [vmem:[#allocation2] sm:$0xff] %vm297, %v296
      %299 = vmax.xlane.f32.xlu0 %v280
      %v300 = vpop.xlane.xlu0 %299
      %v301 = vld [vmem:[#allocation2] sm:$0xff]
      %v302 = vmax.f32 %v301, %v300
      %vm303 = vcmask 23568
      %304 = vst.msk [vmem:[#allocation2] sm:$0xff] %vm303, %v302
      %305 = vmax.xlane.f32.xlu0 %v286
      %v306 = vpop.xlane.xlu0 %305
      %v307 = vld [vmem:[#allocation2] sm:$0xff]
      %v308 = vmax.f32 %v307, %v306
      %vm309 = vcmask 31768
      %310 = vst.msk [vmem:[#allocation2] sm:$0xff] %vm309, %v308
      // Predicated region
      $region33: #{tpu_custom_call.1} parent=27 // pred_check
        %p311 = pneg %p235
      $region34: #{tpu_custom_call.1} parent=27 // pred_check_branch
        %313 = sbr.rel (%p311) target = $region36
      $region35: #{tpu_custom_call.1} parent=27 // pred_region
        %v314 = vld [vmem:[#allocation2] sm:$0xff]
        %vm315 = vcmask 31744
        %316 = vst.msk [vmem:[%s234] sm:$0xff] %vm315, %v314
      $region36: #{tpu_custom_call.1} parent=27 // pred_fallthru
        _
      %p317 = scmp.lt.s32.totalorder %s18, 1
      %s318 = scalar_select %p317, %s18, 1
      %p319 = scmp.lt.s32.totalorder %s19, 0
      %s320 = scalar_select %p319, %s19, 0
      %s321 = sadd.s32 %s320, %s318
      %s322 = smul.addr %s321, 8
      %s323 = scalar_lea.vmem %s2, %s322
      // Predicated region
      $region37: #{tpu_custom_call.1} parent=27 // pred_check
        %p324 = pneg %p110
      $region38: #{tpu_custom_call.1} parent=27 // pred_check_branch
        %326 = sbr.rel (%p324) target = $region40
      $region39: #{tpu_custom_call.1} parent=27 // pred_region
        _
      $region40: #{tpu_custom_call.1} parent=27 // pred_fallthru
        _
    $region28: #{tpu_custom_call.1} parent=5 // pred_fallthru
      _
    %p327 = scmp.le.s32.totalorder 2, %s8
    // Predicated region
    $region41: #{tpu_custom_call.1} parent=5 // pred_check
      %p328 = pneg %p327
    $region42: #{tpu_custom_call.1} parent=5 // pred_check_branch
      %330 = sbr.rel (%p328) target = $region44
    $region43: #{tpu_custom_call.1} parent=5 // pred_region
      %s331 = ssub.s32 %s8, 2
      // Predicated region
      $region45: #{tpu_custom_call.1} parent=43 // pred_check
        %p332 = pneg %p116
      $region46: #{tpu_custom_call.1} parent=43 // pred_check_branch
        %334 = sbr.rel (%p332) target = $region48
      $region47: #{tpu_custom_call.1} parent=43 // pred_region
        %p335 = scmp.lt.s32.totalorder %s21, 1
        %s336 = scalar_select %p335, %s21, 1
        %p337 = scmp.lt.s32.totalorder %s22, 0
        %s338 = scalar_select %p337, %s22, 0
        %s339 = sadd.s32 %s338, %s336
        %s340 = smul.addr %s339, 8
        %s341 = scalar_lea.vmem %s2, %s340
      $region48: #{tpu_custom_call.1} parent=43 // pred_fallthru
        _
    $region44: #{tpu_custom_call.1} parent=5 // pred_fallthru
      _
  $region6: #{tpu_custom_call.1} parent=0 // loop_footer
    %s12 = sadd.s32 1, %s8
  $region7: #{tpu_custom_call.1} parent=0 // loop_footer_branch
    %7 = sbr.rel target = $region3
  $region8: #{tpu_custom_call.1} parent=0 // loop_exit
    _

</llo_original>
